<compile_context>
chip_gen: v7x
topology: tpu7x:2x2x1
jax: 0.10.0
libtpu: 0.0.40
codegen_flags: <defaults>
</compile_context>

<pallas_src>
import functools

import jax
import jax.numpy as jnp
from jax import lax
from jax.experimental import pallas as pl
from jax.experimental.pallas import tpu as pltpu


def _round_up(x, m):
    return (x + m - 1) // m * m


def _vmem_limit_bytes():
    """Generation-aware scoped-VMEM limit (v5e/v6e: 128 MiB phys, v7x: 64 MiB)."""
    cap = 64 << 20  # conservative fallback (v7x per-TensorCore VMEM)
    try:
        info = pltpu.get_tpu_info()
        cap = int(getattr(info, "vmem_capacity_bytes", cap) or cap)
    except Exception:
        pass
    return min(cap * 3 // 4, 112 << 20)


def _per_batch_vmem_bytes(N, C, dpack, dv_pad, dv, x_isz, out_isz, mxu_isz):
    """Worst-case VMEM bytes per batch element resident during one grid step."""
    return (2 * N * C * x_isz               # x block (double-buffered by the pipeline)
            + N * C * mxu_isz               # possible mxu-dtype copy of x
            + 2 * N * dpack * 4             # f32 fused qkv + q/k/v slice copies
            + 2 * N * N * 4                 # scores + probs (f32)
            + N * (N + dv_pad) * mxu_isz    # mxu-dtype copies of p and v for P@V
            + N * dv_pad * 4                # f32 P@V result before the output cast
            + 2 * N * dv * out_isz)         # output block (double-buffered)


def _pick_tiling(B, N, cap_batches):
    """(block_batch, grid_steps); block_batch * grid_steps >= B (batch is padded)."""
    cap = max(1, cap_batches)
    bblk = min(B, cap)
    rows_target = max(1, pl.cdiv(512, N))        # ~512 MXU rows per grid step
    if bblk > rows_target:
        steps = max(1, B // rows_target)         # each step keeps >= the row target
        # v7x megacore: an even number of grid steps keeps both TensorCores busy.
        if steps > 1 and steps % 2 == 1:
            if pl.cdiv(B, steps - 1) <= cap:
                steps -= 1
            elif pl.cdiv(B, steps + 1) * N >= 256:
                steps += 1
        bblk = min(cap, pl.cdiv(B, steps))
    return bblk, pl.cdiv(B, bblk)


def _self_attention_kernel(x_ref, w_ref, b_ref, o_ref, *,
                           dk_pad, dv_pad, n_real, mxu_dtype):
    """One grid step = Bblk batch elements.

    x_ref : (Bblk, Npad, C)               VMEM
    w_ref : (C, 2*dk_pad + dv_pad)        VMEM  (fused q|k|v weights, q pre-scaled)
    b_ref : (1, 2*dk_pad + dv_pad)        VMEM  (fused biases, f32, q pre-scaled)
    o_ref : (Bblk, Npad, dv)              VMEM  (true output width)
    """
    bblk, n, c = x_ref.shape
    dv = o_ref.shape[-1]

    # Merge batch rows into the MXU M dimension (layout-free: n % 8 == 0).
    x2 = x_ref[...].reshape(bblk * n, c).astype(mxu_dtype)

    # Fused QKV projection (softmax scale already folded into q) + bias.
    qkv = jnp.dot(x2, w_ref[...], preferred_element_type=jnp.float32) + b_ref[...]
    qkv = qkv.reshape(bblk, n, 2 * dk_pad + dv_pad)

    q = qkv[:, :, :dk_pad]                   # lane-aligned (128-multiple) slices
    k = qkv[:, :, dk_pad:2 * dk_pad]
    v = qkv[:, :, 2 * dk_pad:]

    # Scores: batched contraction over dk (no explicit transpose of k).
    s = lax.dot_general(
        q.astype(mxu_dtype), k.astype(mxu_dtype),
        dimension_numbers=(((2,), (2,)), ((0,), (0,))),
        preferred_element_type=jnp.float32)                      # (Bblk, n, n)

    if n != n_real:  # mask padded key columns out of the softmax
        col = lax.broadcasted_iota(jnp.int32, (bblk, n, n), 2)
        s = jnp.where(col < n_real, s, jnp.float32(-1e30))

    # Numerically-stable softmax along the key axis.
    s = s - jnp.max(s, axis=-1, keepdims=True)
    p = jnp.exp(s)
    denom = jnp.sum(p, axis=-1, keepdims=True)
    if o_ref.dtype == jnp.float32:
        inv = 1.0 / denom                          # exact for f32 outputs
    else:
        inv = pl.reciprocal(denom, approx=True)    # EUP slot, ~free, for bf16
    p = p * inv

    out = lax.dot_general(
        p.astype(mxu_dtype), v.astype(mxu_dtype),
        dimension_numbers=(((2,), (1,)), ((0,), (0,))),
        preferred_element_type=jnp.float32)                      # (Bblk, n, dv_pad)

    if dv_pad != dv:
        out = out[:, :, :dv]
    o_ref[...] = out.astype(o_ref.dtype)


def self_attention(x, wq, bq, wk, bk, wv, bv, *, scale=None, mxu_dtype=None):
    """x: (B, N, C); weights stored (in_features, out_features). Returns (B, N, dv)."""
    B, N, C = x.shape
    dk = wq.shape[1]
    dv = wv.shape[1]
    if scale is None:
        scale = dk ** (-0.5)
    # MXU operand dtype. Defaults to x.dtype; pass jnp.bfloat16 on v6e/v7x for
    # peak MXU throughput (f32 accumulation via preferred_element_type either way).
    if mxu_dtype is None:
        mxu_dtype = x.dtype
    mxu_dtype = jnp.dtype(mxu_dtype)

    dk_pad = _round_up(dk, 128)
    dv_pad = _round_up(dv, 128)
    dpack = 2 * dk_pad + dv_pad

    def pad_cols(w, dpad):
        return w if w.shape[1] == dpad else jnp.pad(w, ((0, 0), (0, dpad - w.shape[1])))

    def pad_vec(b, dpad):
        return b if b.shape[0] == dpad else jnp.pad(b, (0, dpad - b.shape[0]))

    # Fold the softmax scale into the q projection: one negligible (C, dk)
    # rescale here removes a VPU multiply over (Bblk, N, N) every grid step.
    w_packed = jnp.concatenate(
        [pad_cols(wq * scale, dk_pad), pad_cols(wk, dk_pad), pad_cols(wv, dv_pad)],
        axis=1).astype(mxu_dtype)                               # (C, dpack)
    b_packed = jnp.concatenate(
        [pad_vec(bq * scale, dk_pad), pad_vec(bk, dk_pad), pad_vec(bv, dv_pad)]
    ).astype(jnp.float32).reshape(1, dpack)                     # (1, dpack)

    # Pad N to a sublane multiple so (Bblk, N) merges into the MXU M dimension
    # without a relayout; padded keys are masked inside the kernel.
    n_pad = _round_up(N, 8)

    # Generation-aware VMEM budget (the same limit is handed to the compiler).
    vmem_limit = _vmem_limit_bytes()
    budget = vmem_limit * 4 // 5
    fixed = 2 * (C * dpack * mxu_dtype.itemsize + dpack * 4)    # weight slab + bias
    per_b = _per_batch_vmem_bytes(
        n_pad, C, dpack, dv_pad, dv,
        x.dtype.itemsize, x.dtype.itemsize, mxu_dtype.itemsize)
    cap_batches = max(1, (budget - fixed) // per_b)

    bblk, steps = _pick_tiling(B, n_pad, cap_batches)
    b_pad = bblk * steps

    x_in = x
    if b_pad != B or n_pad != N:
        x_in = jnp.pad(x, ((0, b_pad - B), (0, n_pad - N), (0, 0)))

    kernel = functools.partial(
        _self_attention_kernel,
        dk_pad=dk_pad, dv_pad=dv_pad, n_real=N, mxu_dtype=mxu_dtype)

    def const_spec(shape, single_buffer):
        # The weight/bias block index never changes -> one buffer is enough;
        # fall back to default double buffering if Buffered(1) is unsupported.
        if single_buffer:
            try:
                return pl.BlockSpec(shape, lambda b: (0, 0),
                                    pipeline_mode=pl.Buffered(1))
            except Exception:
                pass
        return pl.BlockSpec(shape, lambda b: (0, 0))

    def call(single_buffer_weights):
        return pl.pallas_call(
            kernel,
            out_shape=jax.ShapeDtypeStruct((b_pad, n_pad, dv), x.dtype),
            grid_spec=pltpu.PrefetchScalarGridSpec(
                num_scalar_prefetch=0,
                grid=(steps,),
                in_specs=[
                    pl.BlockSpec((bblk, n_pad, C), lambda b: (b, 0, 0)),     # x
                    const_spec((C, dpack), single_buffer_weights),           # W_qkv
                    const_spec((1, dpack), single_buffer_weights),           # bias
                ],
                out_specs=pl.BlockSpec((bblk, n_pad, dv), lambda b: (b, 0, 0)),
            ),
            compiler_params=pltpu.CompilerParams(
                dimension_semantics=("parallel",),
                vmem_limit_bytes=int(vmem_limit)),
        )(x_in, w_packed, b_packed)

    try:
        out = call(True)
    except Exception:
        # pl.Buffered(1) not supported by this JAX build: use default buffering.
        out = call(False)

    if b_pad != B or n_pad != N:
        out = out[:B, :N, :]
    return out


def _reference(x, wq, bq, wk, bk, wv, bv, scale):
    q = x @ wq + bq
    k = x @ wk + bk
    v = x @ wv + bv
    att = (q @ jnp.swapaxes(k, -2, -1)) * scale
    att = jax.nn.softmax(att, axis=-1)
    return att @ v


if __name__ == "__main__":
    # Small shapes consistent with the module's forward: (B, N, C).
    B, N, C = 2, 8, 32
    dk, dv = 16, 16
    scale = dk ** (-0.5)

    key = jax.random.PRNGKey(0)
    kx, kwq, kbq, kwk, kbk, kwv, kbv = jax.random.split(key, 7)

    x = jax.random.normal(kx, (B, N, C), dtype=jnp.float32)

    # PyTorch Linear weight is (out, in); we store the transpose (in, out)
    # so the kernel computes x @ W + b directly.
    wq = jax.random.normal(kwq, (C, dk), dtype=jnp.float32) * 0.1
    bq = jax.random.normal(kbq, (dk,), dtype=jnp.float32) * 0.1
    wk = jax.random.normal(kwk, (C, dk), dtype=jnp.float32) * 0.1
    bk = jax.random.normal(kbk, (dk,), dtype=jnp.float32) * 0.1
    wv = jax.random.normal(kwv, (C, dv), dtype=jnp.float32) * 0.1
    bv = jax.random.normal(kbv, (dv,), dtype=jnp.float32) * 0.1

    out = self_attention(x, wq, bq, wk, bk, wv, bv, scale=scale)
    out = jax.block_until_ready(out)

    ref = _reference(x, wq, bq, wk, bk, wv, bv, scale)
    assert out.shape == (B, N, dv), out.shape
    max_err = jnp.max(jnp.abs(out - ref))
    assert jnp.allclose(out, ref, atol=1e-4, rtol=1e-4), f"max abs err = {max_err}"

    print("KERNEL_OK")
</pallas_src>

<mosaic_0001>
module attributes {stable_mosaic.version = 11 : i64} {
  func.func @_self_attention_kernel(%arg0: i32, %arg1: memref<2x8x32xf32, #tpu.memory_space<vmem>>, %arg2: memref<32x384xf32, #tpu.memory_space<vmem>>, %arg3: memref<1x384xf32, #tpu.memory_space<vmem>>, %arg4: memref<2x8x16xf32, #tpu.memory_space<vmem>>) attributes {dimension_semantics = [#tpu.dimension_semantics<parallel>], iteration_bounds = array<i64: 1>, scalar_prefetch = 0 : i64, scratch_operands = 0 : i64, tpu.core_type = #tpu.core_type<tc>, window_params = [{transform_indices = @transform_0, window_bounds = array<i64: 2, 8, 32>}, {pipeline_mode = #tpu.pipeline_mode<synchronous>, transform_indices = @transform_1, window_bounds = array<i64: 32, 384>}, {pipeline_mode = #tpu.pipeline_mode<synchronous>, transform_indices = @transform_2, window_bounds = array<i64: 1, 384>}, {transform_indices = @transform_3, window_bounds = array<i64: 2, 8, 16>}]} {
    %c0 = arith.constant 0 : index
    %c0_0 = arith.constant 0 : index
    %c0_1 = arith.constant 0 : index
    %0 = vector.load %arg1[%c0, %c0_0, %c0_1] : memref<2x8x32xf32, #tpu.memory_space<vmem>>, vector<2x8x32xf32>
    %1 = vector.shape_cast %0 : vector<2x8x32xf32> to vector<16x32xf32>
    %c0_2 = arith.constant 0 : index
    %c0_3 = arith.constant 0 : index
    %2 = vector.load %arg2[%c0_2, %c0_3] : memref<32x384xf32, #tpu.memory_space<vmem>>, vector<32x384xf32>
    %cst = arith.constant dense<0.000000e+00> : vector<16x384xf32>
    %3 = tpu.matmul %1, %2, %cst {dimension_numbers = #tpu.dot_dimension_numbers<[1], [0], [0], [1], [0, 0, 1, 1], [], []>} : vector<16x32xf32>, vector<32x384xf32>, vector<16x384xf32> -> vector<16x384xf32>
    %c0_4 = arith.constant 0 : index
    %c0_5 = arith.constant 0 : index
    %4 = vector.load %arg3[%c0_4, %c0_5] : memref<1x384xf32, #tpu.memory_space<vmem>>, vector<1x384xf32>
    %5 = vector.broadcast %4 : vector<1x384xf32> to vector<16x384xf32>
    %6 = arith.addf %3, %5 : vector<16x384xf32>
    %7 = vector.shape_cast %6 : vector<16x384xf32> to vector<2x8x384xf32>
    %8 = vector.extract_strided_slice %7 {offsets = [0, 0, 0], sizes = [2, 8, 128], strides = [1, 1, 1]} : vector<2x8x384xf32> to vector<2x8x128xf32>
    %9 = vector.extract_strided_slice %7 {offsets = [0, 0, 128], sizes = [2, 8, 128], strides = [1, 1, 1]} : vector<2x8x384xf32> to vector<2x8x128xf32>
    %10 = vector.extract_strided_slice %7 {offsets = [0, 0, 256], sizes = [2, 8, 128], strides = [1, 1, 1]} : vector<2x8x384xf32> to vector<2x8x128xf32>
    %cst_6 = arith.constant dense<0.000000e+00> : vector<2x8x8xf32>
    %11 = tpu.matmul %8, %9, %cst_6 {dimension_numbers = #tpu.dot_dimension_numbers<[2], [2], [1], [1], [0, 0, 0, 1, 1, 1], [0], [0]>} : vector<2x8x128xf32>, vector<2x8x128xf32>, vector<2x8x8xf32> -> vector<2x8x8xf32>
    %cst_7 = arith.constant dense<0xFF800000> : vector<2x8xf32>
    %12 = vector.multi_reduction <maximumf>, %11, %cst_7 [2] : vector<2x8x8xf32> to vector<2x8xf32>
    %13 = vector.shape_cast %12 : vector<2x8xf32> to vector<2x8x1xf32>
    %14 = vector.broadcast %13 : vector<2x8x1xf32> to vector<2x8x8xf32>
    %15 = arith.subf %11, %14 : vector<2x8x8xf32>
    %16 = math.exp %15 : vector<2x8x8xf32>
    %cst_8 = arith.constant dense<0.000000e+00> : vector<2x8xf32>
    %17 = vector.multi_reduction <add>, %16, %cst_8 [2] : vector<2x8x8xf32> to vector<2x8xf32>
    %18 = vector.shape_cast %17 : vector<2x8xf32> to vector<2x8x1xf32>
    %cst_9 = arith.constant 1.000000e+00 : f32
    %19 = vector.broadcast %cst_9 : f32 to vector<2x8x1xf32>
    %20 = arith.divf %19, %18 : vector<2x8x1xf32>
    %21 = vector.broadcast %20 : vector<2x8x1xf32> to vector<2x8x8xf32>
    %22 = arith.mulf %16, %21 : vector<2x8x8xf32>
    %cst_10 = arith.constant dense<0.000000e+00> : vector<2x8x128xf32>
    %23 = tpu.matmul %22, %10, %cst_10 {dimension_numbers = #tpu.dot_dimension_numbers<[2], [1], [1], [2], [0, 0, 0, 1, 1, 2], [0], [0]>} : vector<2x8x8xf32>, vector<2x8x128xf32>, vector<2x8x128xf32> -> vector<2x8x128xf32>
    %24 = vector.extract_strided_slice %23 {offsets = [0, 0, 0], sizes = [2, 8, 16], strides = [1, 1, 1]} : vector<2x8x128xf32> to vector<2x8x16xf32>
    %c0_11 = arith.constant 0 : index
    %c0_12 = arith.constant 0 : index
    %c0_13 = arith.constant 0 : index
    %25 = vector.load %arg4[%c0_11, %c0_12, %c0_13] : memref<2x8x16xf32, #tpu.memory_space<vmem>>, vector<2x8x16xf32>
    tpu.vector_store %arg4[%c0_11, %c0_12, %c0_13], %24 {strides = array<i32>} : memref<2x8x16xf32, #tpu.memory_space<vmem>>, vector<2x8x16xf32>,
    return
  }
  func.func @transform_0(%arg0: i32) -> (i32, i32, i32) {
    %c0_i32 = arith.constant 0 : i32
    %c0_i32_0 = arith.constant 0 : i32
    %c0_i32_1 = arith.constant 0 : i32
    return %arg0, %c0_i32, %c0_i32_0 : i32, i32, i32
  }
  func.func @transform_1(%arg0: i32) -> (i32, i32) {
    %c0_i32 = arith.constant 0 : i32
    %c0_i32_0 = arith.constant 0 : i32
    %c0_i32_1 = arith.constant 0 : i32
    return %c0_i32, %c0_i32_0 : i32, i32
  }
  func.func @transform_2(%arg0: i32) -> (i32, i32) {
    %c0_i32 = arith.constant 0 : i32
    %c0_i32_0 = arith.constant 0 : i32
    %c0_i32_1 = arith.constant 0 : i32
    return %c0_i32, %c0_i32_0 : i32, i32
  }
  func.func @transform_3(%arg0: i32) -> (i32, i32, i32) {
    %c0_i32 = arith.constant 0 : i32
    %c0_i32_0 = arith.constant 0 : i32
    %c0_i32_1 = arith.constant 0 : i32
    return %arg0, %c0_i32, %c0_i32_0 : i32, i32, i32
  }
}

module attributes {stable_mosaic.version = 11 : i64} {
  func.func @_self_attention_kernel(%arg0: i32, %arg1: memref<2x8x32xf32, #tpu.memory_space<vmem>>, %arg2: memref<32x384xf32, #tpu.memory_space<vmem>>, %arg3: memref<1x384xf32, #tpu.memory_space<vmem>>, %arg4: memref<2x8x16xf32, #tpu.memory_space<vmem>>) attributes {dimension_semantics = [#tpu.dimension_semantics<parallel>], iteration_bounds = array<i64: 1>, scalar_prefetch = 0 : i64, scratch_operands = 0 : i64, tpu.core_type = #tpu.core_type<tc>, window_params = [{transform_indices = @transform_0, window_bounds = array<i64: 2, 8, 32>}, {pipeline_mode = #tpu.pipeline_mode<synchronous>, transform_indices = @transform_1, window_bounds = array<i64: 32, 384>}, {pipeline_mode = #tpu.pipeline_mode<synchronous>, transform_indices = @transform_2, window_bounds = array<i64: 1, 384>}, {transform_indices = @transform_3, window_bounds = array<i64: 2, 8, 16>}]} {
    %c0 = arith.constant 0 : index
    %c0_0 = arith.constant 0 : index
    %c0_1 = arith.constant 0 : index
    %0 = vector.load %arg1[%c0, %c0_0, %c0_1] : memref<2x8x32xf32, #tpu.memory_space<vmem>>, vector<2x8x32xf32>
    %1 = vector.shape_cast %0 : vector<2x8x32xf32> to vector<16x32xf32>
    %c0_2 = arith.constant 0 : index
    %c0_3 = arith.constant 0 : index
    %2 = vector.load %arg2[%c0_2, %c0_3] : memref<32x384xf32, #tpu.memory_space<vmem>>, vector<32x384xf32>
    %cst = arith.constant dense<0.000000e+00> : vector<16x384xf32>
    %3 = tpu.matmul %1, %2, %cst {dimension_numbers = #tpu.dot_dimension_numbers<[1], [0], [0], [1], [0, 0, 1, 1], [], []>} : vector<16x32xf32>, vector<32x384xf32>, vector<16x384xf32> -> vector<16x384xf32>
    %c0_4 = arith.constant 0 : index
    %c0_5 = arith.constant 0 : index
    %4 = vector.load %arg3[%c0_4, %c0_5] : memref<1x384xf32, #tpu.memory_space<vmem>>, vector<1x384xf32>
    %5 = vector.broadcast %4 : vector<1x384xf32> to vector<16x384xf32>
    %6 = arith.addf %3, %5 : vector<16x384xf32>
    %7 = vector.shape_cast %6 : vector<16x384xf32> to vector<2x8x384xf32>
    %8 = vector.extract_strided_slice %7 {offsets = [0, 0, 0], sizes = [2, 8, 128], strides = [1, 1, 1]} : vector<2x8x384xf32> to vector<2x8x128xf32>
    %9 = vector.extract_strided_slice %7 {offsets = [0, 0, 128], sizes = [2, 8, 128], strides = [1, 1, 1]} : vector<2x8x384xf32> to vector<2x8x128xf32>
    %10 = vector.extract_strided_slice %7 {offsets = [0, 0, 256], sizes = [2, 8, 128], strides = [1, 1, 1]} : vector<2x8x384xf32> to vector<2x8x128xf32>
    %cst_6 = arith.constant dense<0.000000e+00> : vector<2x8x8xf32>
    %11 = tpu.matmul %8, %9, %cst_6 {dimension_numbers = #tpu.dot_dimension_numbers<[2], [2], [1], [1], [0, 0, 0, 1, 1, 1], [0], [0]>} : vector<2x8x128xf32>, vector<2x8x128xf32>, vector<2x8x8xf32> -> vector<2x8x8xf32>
    %cst_7 = arith.constant dense<0xFF800000> : vector<2x8xf32>
    %12 = vector.multi_reduction <maximumf>, %11, %cst_7 [2] : vector<2x8x8xf32> to vector<2x8xf32>
    %13 = vector.shape_cast %12 : vector<2x8xf32> to vector<2x8x1xf32>
    %14 = vector.broadcast %13 : vector<2x8x1xf32> to vector<2x8x8xf32>
    %15 = arith.subf %11, %14 : vector<2x8x8xf32>
    %16 = math.exp %15 : vector<2x8x8xf32>
    %cst_8 = arith.constant dense<0.000000e+00> : vector<2x8xf32>
    %17 = vector.multi_reduction <add>, %16, %cst_8 [2] : vector<2x8x8xf32> to vector<2x8xf32>
    %18 = vector.shape_cast %17 : vector<2x8xf32> to vector<2x8x1xf32>
    %cst_9 = arith.constant 1.000000e+00 : f32
    %19 = vector.broadcast %cst_9 : f32 to vector<2x8x1xf32>
    %20 = arith.divf %19, %18 : vector<2x8x1xf32>
    %21 = vector.broadcast %20 : vector<2x8x1xf32> to vector<2x8x8xf32>
    %22 = arith.mulf %16, %21 : vector<2x8x8xf32>
    %cst_10 = arith.constant dense<0.000000e+00> : vector<2x8x128xf32>
    %23 = tpu.matmul %22, %10, %cst_10 {dimension_numbers = #tpu.dot_dimension_numbers<[2], [1], [1], [2], [0, 0, 0, 1, 1, 2], [0], [0]>} : vector<2x8x8xf32>, vector<2x8x128xf32>, vector<2x8x128xf32> -> vector<2x8x128xf32>
    %24 = vector.extract_strided_slice %23 {offsets = [0, 0, 0], sizes = [2, 8, 16], strides = [1, 1, 1]} : vector<2x8x128xf32> to vector<2x8x16xf32>
    %c0_11 = arith.constant 0 : index
    %c0_12 = arith.constant 0 : index
    %c0_13 = arith.constant 0 : index
    %25 = vector.load %arg4[%c0_11, %c0_12, %c0_13] : memref<2x8x16xf32, #tpu.memory_space<vmem>>, vector<2x8x16xf32>
    tpu.vector_store %arg4[%c0_11, %c0_12, %c0_13], %24 {strides = array<i32>} : memref<2x8x16xf32, #tpu.memory_space<vmem>>, vector<2x8x16xf32>,
    return
  }
  func.func @transform_0(%arg0: i32) -> (i32, i32, i32) {
    %c0_i32 = arith.constant 0 : i32
    %c0_i32_0 = arith.constant 0 : i32
    %c0_i32_1 = arith.constant 0 : i32
    return %arg0, %c0_i32, %c0_i32_0 : i32, i32, i32
  }
  func.func @transform_1(%arg0: i32) -> (i32, i32) {
    %c0_i32 = arith.constant 0 : i32
    %c0_i32_0 = arith.constant 0 : i32
    %c0_i32_1 = arith.constant 0 : i32
    return %c0_i32, %c0_i32_0 : i32, i32
  }
  func.func @transform_2(%arg0: i32) -> (i32, i32) {
    %c0_i32 = arith.constant 0 : i32
    %c0_i32_0 = arith.constant 0 : i32
    %c0_i32_1 = arith.constant 0 : i32
    return %c0_i32, %c0_i32_0 : i32, i32
  }
  func.func @transform_3(%arg0: i32) -> (i32, i32, i32) {
    %c0_i32 = arith.constant 0 : i32
    %c0_i32_0 = arith.constant 0 : i32
    %c0_i32_1 = arith.constant 0 : i32
    return %arg0, %c0_i32, %c0_i32_0 : i32, i32, i32
  }
}

</mosaic_0001>

<llo_original>
// kernel: tpu_custom_call.1
$region0: #{tpu_custom_call.1}
  #allocation0 [shape = 'u32[]', space=smem, size = 0x4, offset = 0x4, fixed_abs, tag = 'smem constant byte address 0x4 - core index']
  #allocation1 [shape = 'u32[144,128]{1,0:T(1,128)}', space=vmem, size = 0x12000, scoped, tag = 'internal scratch']
  %s0 = inlined_call_operand.hbm [shape: f32[2,8,32], index: 0, kind: input, shape index: {}]
  %s1 = inlined_call_operand.hbm [shape: f32[32,384], index: 1, kind: input, shape index: {}]
  %s2 = inlined_call_operand.vmem [shape: f32[1,384], index: 2, kind: input, shape index: {}]
  %s3 = inlined_call_operand.hbm [shape: f32[2,8,16], index: 3, kind: output, shape index: {}]
  %s4 = sld [smem:[#allocation0]]
  $region30: #{tpu_custom_call.1} parent=0
    _
  %s6 = ssub.s32 1, %s4
  %s7 = scalar_select 0, %s6, %s4
  $region1: #{tpu_custom_call.1} parent=0
    #allocation2 [shape = 'u8[8192]{0}', space=vmem, size = 0x2000, scoped, tag = 'input window, operand 0, single buffered']
    #allocation3 [shape = 's32[1]{0}', space=sflag, size = 0x4, scoped, tag = 'scoped memory for tpu_custom_call.1']
    #allocation4 [shape = 's32[1]{0}', space=sflag, size = 0x4, scoped, tag = 'scoped memory for tpu_custom_call.1']
    #allocation5 [shape = 'u8[49152]{0}', space=vmem, size = 0xc000, scoped, tag = 'input window, operand 1, single buffered']
    #allocation6 [shape = 's32[1]{0}', space=sflag, size = 0x4, scoped, tag = 'scoped memory for tpu_custom_call.1']
    #allocation7 [shape = 'u8[8192]{0}', space=vmem, size = 0x2000, scoped, tag = 'output window, operand 0, single buffered']
    %8 = vsyncpa [#allocation3], 0
    %9 = vsyncpa [#allocation6], 0
    %10 = vsyncpa [#allocation4], 0
    // Predicated region
    $region2: #{tpu_custom_call.1} parent=1 // pred_check
      _
    $region3: #{tpu_custom_call.1} parent=1 // pred_check_branch
      %12 = sbr.rel (0) target = $region5
    $region4: #{tpu_custom_call.1} parent=1 // pred_region
      %s14 = ssub.s32 256, 256
      %15 = vsyncadd [#allocation3], %s14
      %s16 = sshll.u32 [#allocation2], 4
      %s17 = int_to_ptr.vmem [resolvable:$true] %s16
      %22 = dma.hbm_to_vmem [thread:$0]  %s0, 256, %s17, [#allocation3], 128, 128, 8
    $region5: #{tpu_custom_call.1} parent=1 // pred_fallthru
      _
    // Predicated region
    $region6: #{tpu_custom_call.1} parent=1 // pred_check
      _
    $region7: #{tpu_custom_call.1} parent=1 // pred_check_branch
      %24 = sbr.rel (0) target = $region9
    $region8: #{tpu_custom_call.1} parent=1 // pred_region
      %s26 = ssub.s32 1536, 1536
      %27 = vsyncadd [#allocation6], %s26
      %s28 = sshll.u32 [#allocation5], 4
      %s29 = int_to_ptr.vmem [resolvable:$true] %s28
      %34 = dma.hbm_to_vmem [thread:$0]  %s1, 1536, %s29, [#allocation6], 384, 384, 24
    $region9: #{tpu_custom_call.1} parent=1 // pred_fallthru
      _
    // Predicated region
    $region10: #{tpu_custom_call.1} parent=1 // pred_check
      _
    $region11: #{tpu_custom_call.1} parent=1 // pred_check_branch
      %36 = sbr.rel (0) target = $region13
    $region12: #{tpu_custom_call.1} parent=1 // pred_region
      _
    $region13: #{tpu_custom_call.1} parent=1 // pred_fallthru
      _
    // Predicated region
    $region14: #{tpu_custom_call.1} parent=1 // pred_check
      _
    $region15: #{tpu_custom_call.1} parent=1 // pred_check_branch
      %38 = sbr.rel (0) target = $region17
    $region16: #{tpu_custom_call.1} parent=1 // pred_region
      %39 = dma.done [#allocation3], 256
    $region17: #{tpu_custom_call.1} parent=1 // pred_fallthru
      _
    // Predicated region
    $region18: #{tpu_custom_call.1} parent=1 // pred_check
      _
    $region19: #{tpu_custom_call.1} parent=1 // pred_check_branch
      %41 = sbr.rel (0) target = $region21
    $region20: #{tpu_custom_call.1} parent=1 // pred_region
      %42 = dma.done [#allocation6], 1536
    $region21: #{tpu_custom_call.1} parent=1 // pred_fallthru
      _
    %v43 = vld [vmem:[#allocation2] sm:$0xff]
    %v44 = vld [vmem:[#allocation2 + $0x8] sm:$0xff]
    %v45 = vld [vmem:[#allocation5] sm:$0xff]
    %v46 = vld [vmem:[#allocation5 + $0x8] sm:$0xff]
    %v47 = vld [vmem:[#allocation5 + $0x10] sm:$0xff]
    %v48 = vld [vmem:[#allocation5 + $0x18] sm:$0xff]
    %v49 = vld [vmem:[#allocation5 + $0x20] sm:$0xff]
    %v50 = vld [vmem:[#allocation5 + $0x28] sm:$0xff]
    %v51 = vld [vmem:[#allocation5 + $0x30] sm:$0xff]
    %v52 = vld [vmem:[#allocation5 + $0x38] sm:$0xff]
    %v53 = vld [vmem:[#allocation5 + $0x40] sm:$0xff]
    %v54 = vld [vmem:[#allocation5 + $0x48] sm:$0xff]
    %v55 = vld [vmem:[#allocation5 + $0x50] sm:$0xff]
    %v56 = vld [vmem:[#allocation5 + $0x58] sm:$0xff]
    %v57 = vld [vmem:[%s2] sm:$0x7]
    %v59 = vlaneseq
    %v60 = vshrl.u32 %v59, 7
    %v61 = vsub.s32 0, %v60
    %v62 = vrot.slane %v57, %v61
    %v63 = vlaneseq
    %v64 = vshrl.u32 %v63, 7
    %v65 = vsub.s32 1, %v64
    %v66 = vrot.slane %v57, %v65
    %v67 = vlaneseq
    %v68 = vshrl.u32 %v67, 7
    %v69 = vsub.s32 2, %v68
    %v70 = vrot.slane %v57, %v69
    %vm74 = vcmask 261120
    %v76 = vsel %vm74, %v43, 0
    %v79 = vsel %vm74, %v44, 0
    %81 = vmatprep.subr.mxu0 %v46
    %82 = vmatpush1.msra.mxu0 %v45
    %83 = vmatprep.subr.mxu0 %v49
    %84 = vmatpush1.msra.mxu0 %v48
    %85 = vmatprep.subr.mxu0 %v52
    %86 = vmatpush1.msra.mxu0 %v51
    %87 = vmatprep.subr.mxu0 %v55
    %88 = vmatpush1.msra.mxu0 %v54
    %89 = vmatprep.subr.mxu0 0.0
    %90 = vmatpush1.msra.mxu0 0.0
    %91 = vmatprep.subr.mxu0 0.0
    %92 = vmatpush1.msra.mxu0 0.0
    %93 = vmatprep.subr.mxu0 0.0
    %94 = vmatpush1.msra.mxu0 0.0
    %95 = vmatprep.subr.mxu0 0.0
    %96 = vmatpush1.msra.mxu0 0.0
    %97 = vmatprep.subr.mxu0 0.0
    %98 = vmatpush1.msra.mxu0 0.0
    %99 = vmatprep.subr.mxu0 0.0
    %100 = vmatpush1.msra.mxu0 0.0
    %101 = vmatprep.subr.mxu0 0.0
    %102 = vmatpush1.msra.mxu0 0.0
    %103 = vmatprep.subr.mxu0 0.0
    %104 = vmatpush1.msra.mxu0 0.0
    %105 = vmatprep.subr.mxu0 0.0
    %106 = vmatpush1.msra.mxu0 0.0
    %107 = vmatprep.subr.mxu0 0.0
    %108 = vmatpush1.msra.mxu0 0.0
    %109 = vmatprep.subr.mxu0 0.0
    %110 = vmatpush1.msra.mxu0 0.0
    %111 = vmatprep.subr.mxu0 0.0
    %112 = vmatpush1.msra.mxu0 0.0
    %113 = vmatprep.subr.mxu0 0.0
    %114 = vmatpush1.msra.mxu0 0.0
    %115 = vmatprep.subr.mxu0 0.0
    %116 = vmatpush1.msra.mxu0 0.0
    %117 = vmatprep.subr.mxu0 0.0
    %118 = vmatpush1.msra.mxu0 0.0
    %119 = vmatprep.subr.mxu0 0.0
    %120 = vmatpush1.msra.mxu0 0.0
    %121 = vmatprep.subr.mxu0 0.0
    %122 = vmatpush1.msra.mxu0 0.0
    %123 = vmatprep.subr.mxu0 0.0
    %124 = vmatpush1.msra.mxu0 0.0
    %125 = vmatprep.subr.mxu0 0.0
    %126 = vmatpush1.msra.mxu0 0.0
    %127 = vmatprep.subr.mxu0 0.0
    %128 = vmatpush1.msra.mxu0 0.0
    %129 = vmatprep.subr.mxu0 0.0
    %130 = vmatpush1.msra.mxu0 0.0
    %131 = vmatprep.subr.mxu0 0.0
    %132 = vmatpush1.msra.mxu0 0.0
    %133 = vmatprep.subr.mxu0 0.0
    %134 = vmatpush1.msra.mxu0 0.0
    %135 = vmatprep.subr.mxu0 0.0
    %136 = vmatpush1.msra.mxu0 0.0
    %137 = vmatprep.subr.mxu0 0.0
    %138 = vmatpush1.msra.mxu0 0.0
    %139 = vmatprep.subr.mxu0 0.0
    %140 = vmatpush1.msra.mxu0 0.0
    %141 = vmatprep.subr.mxu0 0.0
    %142 = vmatpush1.msra.mxu0 0.0
    %143 = vmatprep.subr.mxu0 0.0
    %144 = vmatpush1.msra.mxu0 0.0
    %145 = vmatprep.mubr.f32.mxu0 0.0
    %146 = vmatmul.mubr.f32.gmra.mrb[0].mxu0 %v76
    %v147 = vpop.f32.mrb[0].mxu0
    %v148 = vadd.f32 %v62, %v147
    %v149 = vpop.f32.mrb[0].mxu0
    %v150 = vadd.f32 %v66, %v149
    %151 = vmatprep.mubr.f32.mxu0 0.0
    %152 = vmatmul.mubr.f32.gmra.mrb[0].mxu0 %v79
    %v153 = vpop.f32.mrb[0].mxu0
    %v154 = vadd.f32 %v62, %v153
    %v155 = vpop.f32.mrb[0].mxu0
    %v156 = vadd.f32 %v66, %v155
    %157 = vdwg.mxu0
    %158 = vmatprep.subr.mxu0 0.0
    %159 = vmatpush1.msra.mxu0 %v47
    %160 = vmatprep.subr.mxu0 0.0
    %161 = vmatpush1.msra.mxu0 %v50
    %162 = vmatprep.subr.mxu0 0.0
    %163 = vmatpush1.msra.mxu0 %v53
    %164 = vmatprep.subr.mxu0 0.0
    %165 = vmatpush1.msra.mxu0 %v56
    %166 = vmatprep.subr.mxu0 0.0
    %167 = vmatpush1.msra.mxu0 0.0
    %168 = vmatprep.subr.mxu0 0.0
    %169 = vmatpush1.msra.mxu0 0.0
    %170 = vmatprep.subr.mxu0 0.0
    %171 = vmatpush1.msra.mxu0 0.0
    %172 = vmatprep.subr.mxu0 0.0
    %173 = vmatpush1.msra.mxu0 0.0
    %174 = vmatprep.subr.mxu0 0.0
    %175 = vmatpush1.msra.mxu0 0.0
    %176 = vmatprep.subr.mxu0 0.0
    %177 = vmatpush1.msra.mxu0 0.0
    %178 = vmatprep.subr.mxu0 0.0
    %179 = vmatpush1.msra.mxu0 0.0
    %180 = vmatprep.subr.mxu0 0.0
    %181 = vmatpush1.msra.mxu0 0.0
    %182 = vmatprep.subr.mxu0 0.0
    %183 = vmatpush1.msra.mxu0 0.0
    %184 = vmatprep.subr.mxu0 0.0
    %185 = vmatpush1.msra.mxu0 0.0
    %186 = vmatprep.subr.mxu0 0.0
    %187 = vmatpush1.msra.mxu0 0.0
    %188 = vmatprep.subr.mxu0 0.0
    %189 = vmatpush1.msra.mxu0 0.0
    %190 = vmatprep.subr.mxu0 0.0
    %191 = vmatpush1.msra.mxu0 0.0
    %192 = vmatprep.subr.mxu0 0.0
    %193 = vmatpush1.msra.mxu0 0.0
    %194 = vmatprep.subr.mxu0 0.0
    %195 = vmatpush1.msra.mxu0 0.0
    %196 = vmatprep.subr.mxu0 0.0
    %197 = vmatpush1.msra.mxu0 0.0
    %198 = vmatprep.subr.mxu0 0.0
    %199 = vmatpush1.msra.mxu0 0.0
    %200 = vmatprep.subr.mxu0 0.0
    %201 = vmatpush1.msra.mxu0 0.0
    %202 = vmatprep.subr.mxu0 0.0
    %203 = vmatpush1.msra.mxu0 0.0
    %204 = vmatprep.subr.mxu0 0.0
    %205 = vmatpush1.msra.mxu0 0.0
    %206 = vmatprep.subr.mxu0 0.0
    %207 = vmatpush1.msra.mxu0 0.0
    %208 = vmatprep.subr.mxu0 0.0
    %209 = vmatpush1.msra.mxu0 0.0
    %210 = vmatprep.subr.mxu0 0.0
    %211 = vmatpush1.msra.mxu0 0.0
    %212 = vmatprep.subr.mxu0 0.0
    %213 = vmatpush1.msra.mxu0 0.0
    %214 = vmatprep.subr.mxu0 0.0
    %215 = vmatpush1.msra.mxu0 0.0
    %216 = vmatprep.subr.mxu0 0.0
    %217 = vmatpush1.msra.mxu0 0.0
    %218 = vmatprep.subr.mxu0 0.0
    %219 = vmatpush1.msra.mxu0 0.0
    %220 = vmatprep.subr.mxu0 0.0
    %221 = vmatpush1.msra.mxu0 0.0
    %222 = vmatprep.mubr.f32.mxu0 0.0
    %223 = vmatmul.mubr.f32.gmra.mrb[0].mxu0 %v76
    %v224 = vpop.f32.mrb[0].mxu0
    %v225 = vadd.f32 %v70, %v224
    %v226 = vpop.f32.mrb[0].mxu0
    %227 = vmatprep.mubr.f32.mxu0 0.0
    %228 = vmatmul.mubr.f32.gmra.mrb[0].mxu0 %v79
    %v229 = vpop.f32.mrb[0].mxu0
    %v230 = vadd.f32 %v70, %v229
    %v231 = vpop.f32.mrb[0].mxu0
    %232 = vdwg.mxu0
    %233 = vmatprep.subr.mxu0 0.0
    %234 = vmatpush1.xpose.msra.mxu0 %v150
    %235 = vmatprep.subr.mxu0 0.0
    %236 = vmatpush1.xpose.msra.mxu0 0.0
    %237 = vmatprep.subr.mxu0 0.0
    %238 = vmatpush1.xpose.msra.mxu0 0.0
    %239 = vmatprep.subr.mxu0 0.0
    %240 = vmatpush1.xpose.msra.mxu0 0.0
    %241 = vmatprep.subr.mxu0 0.0
    %242 = vmatpush1.xpose.msra.mxu0 0.0
    %243 = vmatprep.subr.mxu0 0.0
    %244 = vmatpush1.xpose.msra.mxu0 0.0
    %245 = vmatprep.subr.mxu0 0.0
    %246 = vmatpush1.xpose.msra.mxu0 0.0
    %247 = vmatprep.subr.mxu0 0.0
    %248 = vmatpush1.xpose.msra.mxu0 0.0
    %249 = vmatprep.subr.mxu0 0.0
    %250 = vmatpush1.xpose.msra.mxu0 0.0
    %251 = vmatprep.subr.mxu0 0.0
    %252 = vmatpush1.xpose.msra.mxu0 0.0
    %253 = vmatprep.subr.mxu0 0.0
    %254 = vmatpush1.xpose.msra.mxu0 0.0
    %255 = vmatprep.subr.mxu0 0.0
    %256 = vmatpush1.xpose.msra.mxu0 0.0
    %257 = vmatprep.subr.mxu0 0.0
    %258 = vmatpush1.xpose.msra.mxu0 0.0
    %259 = vmatprep.subr.mxu0 0.0
    %260 = vmatpush1.xpose.msra.mxu0 0.0
    %261 = vmatprep.subr.mxu0 0.0
    %262 = vmatpush1.xpose.msra.mxu0 0.0
    %263 = vmatprep.subr.mxu0 0.0
    %264 = vmatpush1.xpose.msra.mxu0 0.0
    %265 = vmatprep.subr.mxu0 0.0
    %266 = vmatpush1.xpose.msra.mxu0 0.0
    %267 = vmatprep.subr.mxu0 0.0
    %268 = vmatpush1.xpose.msra.mxu0 0.0
    %269 = vmatprep.subr.mxu0 0.0
    %270 = vmatpush1.xpose.msra.mxu0 0.0
    %271 = vmatprep.subr.mxu0 0.0
    %272 = vmatpush1.xpose.msra.mxu0 0.0
    %273 = vmatprep.subr.mxu0 0.0
    %274 = vmatpush1.xpose.msra.mxu0 0.0
    %275 = vmatprep.subr.mxu0 0.0
    %276 = vmatpush1.xpose.msra.mxu0 0.0
    %277 = vmatprep.subr.mxu0 0.0
    %278 = vmatpush1.xpose.msra.mxu0 0.0
    %279 = vmatprep.subr.mxu0 0.0
    %280 = vmatpush1.xpose.msra.mxu0 0.0
    %281 = vmatprep.subr.mxu0 0.0
    %282 = vmatpush1.xpose.msra.mxu0 0.0
    %283 = vmatprep.subr.mxu0 0.0
    %284 = vmatpush1.xpose.msra.mxu0 0.0
    %285 = vmatprep.subr.mxu0 0.0
    %286 = vmatpush1.xpose.msra.mxu0 0.0
    %287 = vmatprep.subr.mxu0 0.0
    %288 = vmatpush1.xpose.msra.mxu0 0.0
    %289 = vmatprep.subr.mxu0 0.0
    %290 = vmatpush1.xpose.msra.mxu0 0.0
    %291 = vmatprep.subr.mxu0 0.0
    %292 = vmatpush1.xpose.msra.mxu0 0.0
    %293 = vmatprep.subr.mxu0 0.0
    %294 = vmatpush1.xpose.msra.mxu0 0.0
    %295 = vmatprep.subr.mxu0 0.0
    %296 = vmatpush1.xpose.msra.mxu0 0.0
    %297 = vmatprep.mubr.f32.mxu0 0.0
    %298 = vmatmul.mubr.f32.gmra.mrb[0].mxu0 %v148
    %v299 = vpop.f32.mrb[0].mxu0
    %v300 = vadd.f32 0.0, %v299
    %v301 = vpop.f32.mrb[0].mxu0
    %302 = vdwg.mxu0
    %303 = vmatprep.subr.mxu0 0.0
    %304 = vmatpush1.xpose.msra.mxu0 %v156
    %305 = vmatprep.subr.mxu0 0.0
    %306 = vmatpush1.xpose.msra.mxu0 0.0
    %307 = vmatprep.subr.mxu0 0.0
    %308 = vmatpush1.xpose.msra.mxu0 0.0
    %309 = vmatprep.subr.mxu0 0.0
    %310 = vmatpush1.xpose.msra.mxu0 0.0
    %311 = vmatprep.subr.mxu0 0.0
    %312 = vmatpush1.xpose.msra.mxu0 0.0
    %313 = vmatprep.subr.mxu0 0.0
    %314 = vmatpush1.xpose.msra.mxu0 0.0
    %315 = vmatprep.subr.mxu0 0.0
    %316 = vmatpush1.xpose.msra.mxu0 0.0
    %317 = vmatprep.subr.mxu0 0.0
    %318 = vmatpush1.xpose.msra.mxu0 0.0
    %319 = vmatprep.subr.mxu0 0.0
    %320 = vmatpush1.xpose.msra.mxu0 0.0
    %321 = vmatprep.subr.mxu0 0.0
    %322 = vmatpush1.xpose.msra.mxu0 0.0
    %323 = vmatprep.subr.mxu0 0.0
    %324 = vmatpush1.xpose.msra.mxu0 0.0
    %325 = vmatprep.subr.mxu0 0.0
    %326 = vmatpush1.xpose.msra.mxu0 0.0
    %327 = vmatprep.subr.mxu0 0.0
    %328 = vmatpush1.xpose.msra.mxu0 0.0
    %329 = vmatprep.subr.mxu0 0.0
    %330 = vmatpush1.xpose.msra.mxu0 0.0
    %331 = vmatprep.subr.mxu0 0.0
    %332 = vmatpush1.xpose.msra.mxu0 0.0
    %333 = vmatprep.subr.mxu0 0.0
    %334 = vmatpush1.xpose.msra.mxu0 0.0
    %335 = vmatprep.subr.mxu0 0.0
    %336 = vmatpush1.xpose.msra.mxu0 0.0
    %337 = vmatprep.subr.mxu0 0.0
    %338 = vmatpush1.xpose.msra.mxu0 0.0
    %339 = vmatprep.subr.mxu0 0.0
    %340 = vmatpush1.xpose.msra.mxu0 0.0
    %341 = vmatprep.subr.mxu0 0.0
    %342 = vmatpush1.xpose.msra.mxu0 0.0
    %343 = vmatprep.subr.mxu0 0.0
    %344 = vmatpush1.xpose.msra.mxu0 0.0
    %345 = vmatprep.subr.mxu0 0.0
    %346 = vmatpush1.xpose.msra.mxu0 0.0
    %347 = vmatprep.subr.mxu0 0.0
    %348 = vmatpush1.xpose.msra.mxu0 0.0
    %349 = vmatprep.subr.mxu0 0.0
    %350 = vmatpush1.xpose.msra.mxu0 0.0
    %351 = vmatprep.subr.mxu0 0.0
    %352 = vmatpush1.xpose.msra.mxu0 0.0
    %353 = vmatprep.subr.mxu0 0.0
    %354 = vmatpush1.xpose.msra.mxu0 0.0
    %355 = vmatprep.subr.mxu0 0.0
    %356 = vmatpush1.xpose.msra.mxu0 0.0
    %357 = vmatprep.subr.mxu0 0.0
    %358 = vmatpush1.xpose.msra.mxu0 0.0
    %359 = vmatprep.subr.mxu0 0.0
    %360 = vmatpush1.xpose.msra.mxu0 0.0
    %361 = vmatprep.subr.mxu0 0.0
    %362 = vmatpush1.xpose.msra.mxu0 0.0
    %363 = vmatprep.subr.mxu0 0.0
    %364 = vmatpush1.xpose.msra.mxu0 0.0
    %365 = vmatprep.subr.mxu0 0.0
    %366 = vmatpush1.xpose.msra.mxu0 0.0
    %367 = vmatprep.mubr.f32.mxu0 0.0
    %368 = vmatmul.mubr.f32.gmra.mrb[0].mxu0 %v154
    %v369 = vpop.f32.mrb[0].mxu0
    %v370 = vadd.f32 0.0, %v369
    %v371 = vpop.f32.mrb[0].mxu0
    %372 = vdwg.mxu0
    %vm373 = vcmask 64512
    %v374 = vsel %vm373, %v300, -inf
    %375 = vmax.xlane.f32.xlu0 %v374
    %v376 = vpop.xlane.xlu0 %375
    %v377 = vsel %vm373, %v370, -inf
    %378 = vmax.xlane.f32.xlu0 %v377
    %v379 = vpop.xlane.xlu0 %378
    %v380 = vsub.f32 %v300, %v376
    %v381 = vsub.f32 %v370, %v379
    %v382 = vmul.f32 %v380, 1.442695
    %v383 = vpow.pop %v382
    %v384 = vmul.f32 %v381, 1.442695
    %v385 = vpow.pop %v384
    %v386 = vsel %vm373, %v383, 0.0
    %387 = vadd.xlane.f32.xlu0 %v386
    %v388 = vpop.xlane.xlu0 %387
    %v389 = vsel %vm373, %v385, 0.0
    %390 = vadd.xlane.f32.xlu0 %v389
    %v391 = vpop.xlane.xlu0 %390
    %v392 = vrcp.pop %v388
    %v393 = vmul.f32 1.0, %v392
    %v394 = vrcp.pop %v391
    %v395 = vmul.f32 1.0, %v394
    %v396 = vmul.f32 %v383, %v393
    %v397 = vmul.f32 %v385, %v395
    %v399 = vsel %vm373, %v396, 0
    %401 = vmatprep.subr.mxu0 0.0
    %402 = vmatpush1.msra.mxu0 %v225
    %403 = vmatprep.subr.mxu0 0.0
    %404 = vmatpush1.msra.mxu0 0.0
    %405 = vmatprep.subr.mxu0 0.0
    %406 = vmatpush1.msra.mxu0 0.0
    %407 = vmatprep.subr.mxu0 0.0
    %408 = vmatpush1.msra.mxu0 0.0
    %409 = vmatprep.subr.mxu0 0.0
    %410 = vmatpush1.msra.mxu0 0.0
    %411 = vmatprep.subr.mxu0 0.0
    %412 = vmatpush1.msra.mxu0 0.0
    %413 = vmatprep.subr.mxu0 0.0
    %414 = vmatpush1.msra.mxu0 0.0
    %415 = vmatprep.subr.mxu0 0.0
    %416 = vmatpush1.msra.mxu0 0.0
    %417 = vmatprep.subr.mxu0 0.0
    %418 = vmatpush1.msra.mxu0 0.0
    %419 = vmatprep.subr.mxu0 0.0
    %420 = vmatpush1.msra.mxu0 0.0
    %421 = vmatprep.subr.mxu0 0.0
    %422 = vmatpush1.msra.mxu0 0.0
    %423 = vmatprep.subr.mxu0 0.0
    %424 = vmatpush1.msra.mxu0 0.0
    %425 = vmatprep.subr.mxu0 0.0
    %426 = vmatpush1.msra.mxu0 0.0
    %427 = vmatprep.subr.mxu0 0.0
    %428 = vmatpush1.msra.mxu0 0.0
    %429 = vmatprep.subr.mxu0 0.0
    %430 = vmatpush1.msra.mxu0 0.0
    %431 = vmatprep.subr.mxu0 0.0
    %432 = vmatpush1.msra.mxu0 0.0
    %433 = vmatprep.subr.mxu0 0.0
    %434 = vmatpush1.msra.mxu0 0.0
    %435 = vmatprep.subr.mxu0 0.0
    %436 = vmatpush1.msra.mxu0 0.0
    %437 = vmatprep.subr.mxu0 0.0
    %438 = vmatpush1.msra.mxu0 0.0
    %439 = vmatprep.subr.mxu0 0.0
    %440 = vmatpush1.msra.mxu0 0.0
    %441 = vmatprep.subr.mxu0 0.0
    %442 = vmatpush1.msra.mxu0 0.0
    %443 = vmatprep.subr.mxu0 0.0
    %444 = vmatpush1.msra.mxu0 0.0
    %445 = vmatprep.subr.mxu0 0.0
    %446 = vmatpush1.msra.mxu0 0.0
    %447 = vmatprep.subr.mxu0 0.0
    %448 = vmatpush1.msra.mxu0 0.0
    %449 = vmatprep.subr.mxu0 0.0
    %450 = vmatpush1.msra.mxu0 0.0
    %451 = vmatprep.subr.mxu0 0.0
    %452 = vmatpush1.msra.mxu0 0.0
    %453 = vmatprep.subr.mxu0 0.0
    %454 = vmatpush1.msra.mxu0 0.0
    %455 = vmatprep.subr.mxu0 0.0
    %456 = vmatpush1.msra.mxu0 0.0
    %457 = vmatprep.subr.mxu0 0.0
    %458 = vmatpush1.msra.mxu0 0.0
    %459 = vmatprep.subr.mxu0 0.0
    %460 = vmatpush1.msra.mxu0 0.0
    %461 = vmatprep.subr.mxu0 0.0
    %462 = vmatpush1.msra.mxu0 0.0
    %463 = vmatprep.subr.mxu0 0.0
    %464 = vmatpush1.msra.mxu0 0.0
    %465 = vmatprep.mubr.f32.mxu0 0.0
    %466 = vmatmul.mubr.f32.gmra.mrb[0].mxu0 %v399
    %v467 = vpop.f32.mrb[0].mxu0
    %v468 = vadd.f32 0.0, %v467
    %v469 = vpop.f32.mrb[0].mxu0
    %470 = vdwg.mxu0
    %v472 = vsel %vm373, %v397, 0
    %474 = vmatprep.subr.mxu0 0.0
    %475 = vmatpush1.msra.mxu0 %v230
    %476 = vmatprep.subr.mxu0 0.0
    %477 = vmatpush1.msra.mxu0 0.0
    %478 = vmatprep.subr.mxu0 0.0
    %479 = vmatpush1.msra.mxu0 0.0
    %480 = vmatprep.subr.mxu0 0.0
    %481 = vmatpush1.msra.mxu0 0.0
    %482 = vmatprep.subr.mxu0 0.0
    %483 = vmatpush1.msra.mxu0 0.0
    %484 = vmatprep.subr.mxu0 0.0
    %485 = vmatpush1.msra.mxu0 0.0
    %486 = vmatprep.subr.mxu0 0.0
    %487 = vmatpush1.msra.mxu0 0.0
    %488 = vmatprep.subr.mxu0 0.0
    %489 = vmatpush1.msra.mxu0 0.0
    %490 = vmatprep.subr.mxu0 0.0
    %491 = vmatpush1.msra.mxu0 0.0
    %492 = vmatprep.subr.mxu0 0.0
    %493 = vmatpush1.msra.mxu0 0.0
    %494 = vmatprep.subr.mxu0 0.0
    %495 = vmatpush1.msra.mxu0 0.0
    %496 = vmatprep.subr.mxu0 0.0
    %497 = vmatpush1.msra.mxu0 0.0
    %498 = vmatprep.subr.mxu0 0.0
    %499 = vmatpush1.msra.mxu0 0.0
    %500 = vmatprep.subr.mxu0 0.0
    %501 = vmatpush1.msra.mxu0 0.0
    %502 = vmatprep.subr.mxu0 0.0
    %503 = vmatpush1.msra.mxu0 0.0
    %504 = vmatprep.subr.mxu0 0.0
    %505 = vmatpush1.msra.mxu0 0.0
    %506 = vmatprep.subr.mxu0 0.0
    %507 = vmatpush1.msra.mxu0 0.0
    %508 = vmatprep.subr.mxu0 0.0
    %509 = vmatpush1.msra.mxu0 0.0
    %510 = vmatprep.subr.mxu0 0.0
    %511 = vmatpush1.msra.mxu0 0.0
    %512 = vmatprep.subr.mxu0 0.0
    %513 = vmatpush1.msra.mxu0 0.0
    %514 = vmatprep.subr.mxu0 0.0
    %515 = vmatpush1.msra.mxu0 0.0
    %516 = vmatprep.subr.mxu0 0.0
    %517 = vmatpush1.msra.mxu0 0.0
    %518 = vmatprep.subr.mxu0 0.0
    %519 = vmatpush1.msra.mxu0 0.0
    %520 = vmatprep.subr.mxu0 0.0
    %521 = vmatpush1.msra.mxu0 0.0
    %522 = vmatprep.subr.mxu0 0.0
    %523 = vmatpush1.msra.mxu0 0.0
    %524 = vmatprep.subr.mxu0 0.0
    %525 = vmatpush1.msra.mxu0 0.0
    %526 = vmatprep.subr.mxu0 0.0
    %527 = vmatpush1.msra.mxu0 0.0
    %528 = vmatprep.subr.mxu0 0.0
    %529 = vmatpush1.msra.mxu0 0.0
    %530 = vmatprep.subr.mxu0 0.0
    %531 = vmatpush1.msra.mxu0 0.0
    %532 = vmatprep.subr.mxu0 0.0
    %533 = vmatpush1.msra.mxu0 0.0
    %534 = vmatprep.subr.mxu0 0.0
    %535 = vmatpush1.msra.mxu0 0.0
    %536 = vmatprep.subr.mxu0 0.0
    %537 = vmatpush1.msra.mxu0 0.0
    %538 = vmatprep.mubr.f32.mxu0 0.0
    %539 = vmatmul.mubr.f32.gmra.mrb[0].mxu0 %v472
    %v540 = vpop.f32.mrb[0].mxu0
    %v541 = vadd.f32 0.0, %v540
    %v542 = vpop.f32.mrb[0].mxu0
    %543 = vdwg.mxu0
    %vm544 = vcmask 130048
    %545 = vst.msk [vmem:[#allocation7] sm:$0xff] %vm544, %v468
    %546 = vst.msk [vmem:[#allocation7 + $0x8] sm:$0xff] %vm544, %v541
    // Predicated region
    $region22: #{tpu_custom_call.1} parent=1 // pred_check
      _
    $region23: #{tpu_custom_call.1} parent=1 // pred_check_branch
      %548 = sbr.rel (0) target = $region25
    $region24: #{tpu_custom_call.1} parent=1 // pred_region
      %s550 = ssub.s32 256, 256
      %551 = vsyncadd [#allocation4], %s550
      %s552 = sshll.u32 [#allocation7], 4
      %s553 = int_to_ptr.vmem [resolvable:$true] %s552
      %558 = dma.vmem_to_hbm [thread:$0]  %s553, 256, %s3, [#allocation4], 128, 128, 8
    $region25: #{tpu_custom_call.1} parent=1 // pred_fallthru
      _
    // Predicated region
    $region26: #{tpu_custom_call.1} parent=1 // pred_check
      _
    $region27: #{tpu_custom_call.1} parent=1 // pred_check_branch
      %560 = sbr.rel (0) target = $region29
    $region28: #{tpu_custom_call.1} parent=1 // pred_region
      %561 = dma.done [#allocation4], 256
    $region29: #{tpu_custom_call.1} parent=1 // pred_fallthru
      _
    %562 = vsyncpa [#allocation3], 1
    %563 = vsyncpa [#allocation6], 1
    %564 = vsyncpa [#allocation4], 1

// kernel: tpu_custom_call.1
$region0: #{tpu_custom_call.1}
  #allocation0 [shape = 'u32[]', space=smem, size = 0x4, offset = 0x4, fixed_abs, tag = 'smem constant byte address 0x4 - core index']
  #allocation1 [shape = 'u32[144,128]{1,0:T(1,128)}', space=vmem, size = 0x12000, scoped, tag = 'internal scratch']
  %s0 = inlined_call_operand.hbm [shape: f32[2,8,32], index: 0, kind: input, shape index: {}]
  %s1 = inlined_call_operand.hbm [shape: f32[32,384], index: 1, kind: input, shape index: {}]
  %s2 = inlined_call_operand.vmem [shape: f32[1,384], index: 2, kind: input, shape index: {}]
  %s3 = inlined_call_operand.hbm [shape: f32[2,8,16], index: 3, kind: output, shape index: {}]
  %s4 = sld [smem:[#allocation0]]
  $region30: #{tpu_custom_call.1} parent=0
    _
  %s6 = ssub.s32 1, %s4
  %s7 = scalar_select 0, %s6, %s4
  $region1: #{tpu_custom_call.1} parent=0
    #allocation2 [shape = 'u8[8192]{0}', space=vmem, size = 0x2000, scoped, tag = 'input window, operand 0, single buffered']
    #allocation3 [shape = 's32[1]{0}', space=sflag, size = 0x4, scoped, tag = 'scoped memory for tpu_custom_call.1']
    #allocation4 [shape = 's32[1]{0}', space=sflag, size = 0x4, scoped, tag = 'scoped memory for tpu_custom_call.1']
    #allocation5 [shape = 'u8[49152]{0}', space=vmem, size = 0xc000, scoped, tag = 'input window, operand 1, single buffered']
    #allocation6 [shape = 's32[1]{0}', space=sflag, size = 0x4, scoped, tag = 'scoped memory for tpu_custom_call.1']
    #allocation7 [shape = 'u8[8192]{0}', space=vmem, size = 0x2000, scoped, tag = 'output window, operand 0, single buffered']
    %8 = vsyncpa [#allocation3], 0
    %9 = vsyncpa [#allocation6], 0
    %10 = vsyncpa [#allocation4], 0
    // Predicated region
    $region2: #{tpu_custom_call.1} parent=1 // pred_check
      _
    $region3: #{tpu_custom_call.1} parent=1 // pred_check_branch
      %12 = sbr.rel (0) target = $region5
    $region4: #{tpu_custom_call.1} parent=1 // pred_region
      %s14 = ssub.s32 256, 256
      %15 = vsyncadd [#allocation3], %s14
      %s16 = sshll.u32 [#allocation2], 4
      %s17 = int_to_ptr.vmem [resolvable:$true] %s16
      %22 = dma.hbm_to_vmem [thread:$0]  %s0, 256, %s17, [#allocation3], 128, 128, 8
    $region5: #{tpu_custom_call.1} parent=1 // pred_fallthru
      _
    // Predicated region
    $region6: #{tpu_custom_call.1} parent=1 // pred_check
      _
    $region7: #{tpu_custom_call.1} parent=1 // pred_check_branch
      %24 = sbr.rel (0) target = $region9
    $region8: #{tpu_custom_call.1} parent=1 // pred_region
      %s26 = ssub.s32 1536, 1536
      %27 = vsyncadd [#allocation6], %s26
      %s28 = sshll.u32 [#allocation5], 4
      %s29 = int_to_ptr.vmem [resolvable:$true] %s28
      %34 = dma.hbm_to_vmem [thread:$0]  %s1, 1536, %s29, [#allocation6], 384, 384, 24
    $region9: #{tpu_custom_call.1} parent=1 // pred_fallthru
      _
    // Predicated region
    $region10: #{tpu_custom_call.1} parent=1 // pred_check
      _
    $region11: #{tpu_custom_call.1} parent=1 // pred_check_branch
      %36 = sbr.rel (0) target = $region13
    $region12: #{tpu_custom_call.1} parent=1 // pred_region
      _
    $region13: #{tpu_custom_call.1} parent=1 // pred_fallthru
      _
    // Predicated region
    $region14: #{tpu_custom_call.1} parent=1 // pred_check
      _
    $region15: #{tpu_custom_call.1} parent=1 // pred_check_branch
      %38 = sbr.rel (0) target = $region17
    $region16: #{tpu_custom_call.1} parent=1 // pred_region
      %39 = dma.done [#allocation3], 256
    $region17: #{tpu_custom_call.1} parent=1 // pred_fallthru
      _
    // Predicated region
    $region18: #{tpu_custom_call.1} parent=1 // pred_check
      _
    $region19: #{tpu_custom_call.1} parent=1 // pred_check_branch
      %41 = sbr.rel (0) target = $region21
    $region20: #{tpu_custom_call.1} parent=1 // pred_region
      %42 = dma.done [#allocation6], 1536
    $region21: #{tpu_custom_call.1} parent=1 // pred_fallthru
      _
    %v43 = vld [vmem:[#allocation2] sm:$0xff]
    %v44 = vld [vmem:[#allocation2 + $0x8] sm:$0xff]
    %v45 = vld [vmem:[#allocation5] sm:$0xff]
    %v46 = vld [vmem:[#allocation5 + $0x8] sm:$0xff]
    %v47 = vld [vmem:[#allocation5 + $0x10] sm:$0xff]
    %v48 = vld [vmem:[#allocation5 + $0x18] sm:$0xff]
    %v49 = vld [vmem:[#allocation5 + $0x20] sm:$0xff]
    %v50 = vld [vmem:[#allocation5 + $0x28] sm:$0xff]
    %v51 = vld [vmem:[#allocation5 + $0x30] sm:$0xff]
    %v52 = vld [vmem:[#allocation5 + $0x38] sm:$0xff]
    %v53 = vld [vmem:[#allocation5 + $0x40] sm:$0xff]
    %v54 = vld [vmem:[#allocation5 + $0x48] sm:$0xff]
    %v55 = vld [vmem:[#allocation5 + $0x50] sm:$0xff]
    %v56 = vld [vmem:[#allocation5 + $0x58] sm:$0xff]
    %v57 = vld [vmem:[%s2] sm:$0x7]
    %v59 = vlaneseq
    %v60 = vshrl.u32 %v59, 7
    %v61 = vsub.s32 0, %v60
    %v62 = vrot.slane %v57, %v61
    %v63 = vlaneseq
    %v64 = vshrl.u32 %v63, 7
    %v65 = vsub.s32 1, %v64
    %v66 = vrot.slane %v57, %v65
    %v67 = vlaneseq
    %v68 = vshrl.u32 %v67, 7
    %v69 = vsub.s32 2, %v68
    %v70 = vrot.slane %v57, %v69
    %vm74 = vcmask 261120
    %v76 = vsel %vm74, %v43, 0
    %v79 = vsel %vm74, %v44, 0
    %81 = vmatprep.subr.mxu0 %v46
    %82 = vmatpush1.msra.mxu0 %v45
    %83 = vmatprep.subr.mxu0 %v49
    %84 = vmatpush1.msra.mxu0 %v48
    %85 = vmatprep.subr.mxu0 %v52
    %86 = vmatpush1.msra.mxu0 %v51
    %87 = vmatprep.subr.mxu0 %v55
    %88 = vmatpush1.msra.mxu0 %v54
    %89 = vmatprep.subr.mxu0 0.0
    %90 = vmatpush1.msra.mxu0 0.0
    %91 = vmatprep.subr.mxu0 0.0
    %92 = vmatpush1.msra.mxu0 0.0
    %93 = vmatprep.subr.mxu0 0.0
    %94 = vmatpush1.msra.mxu0 0.0
    %95 = vmatprep.subr.mxu0 0.0
    %96 = vmatpush1.msra.mxu0 0.0
    %97 = vmatprep.subr.mxu0 0.0
    %98 = vmatpush1.msra.mxu0 0.0
    %99 = vmatprep.subr.mxu0 0.0
    %100 = vmatpush1.msra.mxu0 0.0
    %101 = vmatprep.subr.mxu0 0.0
    %102 = vmatpush1.msra.mxu0 0.0
    %103 = vmatprep.subr.mxu0 0.0
    %104 = vmatpush1.msra.mxu0 0.0
    %105 = vmatprep.subr.mxu0 0.0
    %106 = vmatpush1.msra.mxu0 0.0
    %107 = vmatprep.subr.mxu0 0.0
    %108 = vmatpush1.msra.mxu0 0.0
    %109 = vmatprep.subr.mxu0 0.0
    %110 = vmatpush1.msra.mxu0 0.0
    %111 = vmatprep.subr.mxu0 0.0
    %112 = vmatpush1.msra.mxu0 0.0
    %113 = vmatprep.subr.mxu0 0.0
    %114 = vmatpush1.msra.mxu0 0.0
    %115 = vmatprep.subr.mxu0 0.0
    %116 = vmatpush1.msra.mxu0 0.0
    %117 = vmatprep.subr.mxu0 0.0
    %118 = vmatpush1.msra.mxu0 0.0
    %119 = vmatprep.subr.mxu0 0.0
    %120 = vmatpush1.msra.mxu0 0.0
    %121 = vmatprep.subr.mxu0 0.0
    %122 = vmatpush1.msra.mxu0 0.0
    %123 = vmatprep.subr.mxu0 0.0
    %124 = vmatpush1.msra.mxu0 0.0
    %125 = vmatprep.subr.mxu0 0.0
    %126 = vmatpush1.msra.mxu0 0.0
    %127 = vmatprep.subr.mxu0 0.0
    %128 = vmatpush1.msra.mxu0 0.0
    %129 = vmatprep.subr.mxu0 0.0
    %130 = vmatpush1.msra.mxu0 0.0
    %131 = vmatprep.subr.mxu0 0.0
    %132 = vmatpush1.msra.mxu0 0.0
    %133 = vmatprep.subr.mxu0 0.0
    %134 = vmatpush1.msra.mxu0 0.0
    %135 = vmatprep.subr.mxu0 0.0
    %136 = vmatpush1.msra.mxu0 0.0
    %137 = vmatprep.subr.mxu0 0.0
    %138 = vmatpush1.msra.mxu0 0.0
    %139 = vmatprep.subr.mxu0 0.0
    %140 = vmatpush1.msra.mxu0 0.0
    %141 = vmatprep.subr.mxu0 0.0
    %142 = vmatpush1.msra.mxu0 0.0
    %143 = vmatprep.subr.mxu0 0.0
    %144 = vmatpush1.msra.mxu0 0.0
    %145 = vmatprep.mubr.f32.mxu0 0.0
    %146 = vmatmul.mubr.f32.gmra.mrb[0].mxu0 %v76
    %v147 = vpop.f32.mrb[0].mxu0
    %v148 = vadd.f32 %v62, %v147
    %v149 = vpop.f32.mrb[0].mxu0
    %v150 = vadd.f32 %v66, %v149
    %151 = vmatprep.mubr.f32.mxu0 0.0
    %152 = vmatmul.mubr.f32.gmra.mrb[0].mxu0 %v79
    %v153 = vpop.f32.mrb[0].mxu0
    %v154 = vadd.f32 %v62, %v153
    %v155 = vpop.f32.mrb[0].mxu0
    %v156 = vadd.f32 %v66, %v155
    %157 = vdwg.mxu0
    %158 = vmatprep.subr.mxu0 0.0
    %159 = vmatpush1.msra.mxu0 %v47
    %160 = vmatprep.subr.mxu0 0.0
    %161 = vmatpush1.msra.mxu0 %v50
    %162 = vmatprep.subr.mxu0 0.0
    %163 = vmatpush1.msra.mxu0 %v53
    %164 = vmatprep.subr.mxu0 0.0
    %165 = vmatpush1.msra.mxu0 %v56
    %166 = vmatprep.subr.mxu0 0.0
    %167 = vmatpush1.msra.mxu0 0.0
    %168 = vmatprep.subr.mxu0 0.0
    %169 = vmatpush1.msra.mxu0 0.0
    %170 = vmatprep.subr.mxu0 0.0
    %171 = vmatpush1.msra.mxu0 0.0
    %172 = vmatprep.subr.mxu0 0.0
    %173 = vmatpush1.msra.mxu0 0.0
    %174 = vmatprep.subr.mxu0 0.0
    %175 = vmatpush1.msra.mxu0 0.0
    %176 = vmatprep.subr.mxu0 0.0
    %177 = vmatpush1.msra.mxu0 0.0
    %178 = vmatprep.subr.mxu0 0.0
    %179 = vmatpush1.msra.mxu0 0.0
    %180 = vmatprep.subr.mxu0 0.0
    %181 = vmatpush1.msra.mxu0 0.0
    %182 = vmatprep.subr.mxu0 0.0
    %183 = vmatpush1.msra.mxu0 0.0
    %184 = vmatprep.subr.mxu0 0.0
    %185 = vmatpush1.msra.mxu0 0.0
    %186 = vmatprep.subr.mxu0 0.0
    %187 = vmatpush1.msra.mxu0 0.0
    %188 = vmatprep.subr.mxu0 0.0
    %189 = vmatpush1.msra.mxu0 0.0
    %190 = vmatprep.subr.mxu0 0.0
    %191 = vmatpush1.msra.mxu0 0.0
    %192 = vmatprep.subr.mxu0 0.0
    %193 = vmatpush1.msra.mxu0 0.0
    %194 = vmatprep.subr.mxu0 0.0
    %195 = vmatpush1.msra.mxu0 0.0
    %196 = vmatprep.subr.mxu0 0.0
    %197 = vmatpush1.msra.mxu0 0.0
    %198 = vmatprep.subr.mxu0 0.0
    %199 = vmatpush1.msra.mxu0 0.0
    %200 = vmatprep.subr.mxu0 0.0
    %201 = vmatpush1.msra.mxu0 0.0
    %202 = vmatprep.subr.mxu0 0.0
    %203 = vmatpush1.msra.mxu0 0.0
    %204 = vmatprep.subr.mxu0 0.0
    %205 = vmatpush1.msra.mxu0 0.0
    %206 = vmatprep.subr.mxu0 0.0
    %207 = vmatpush1.msra.mxu0 0.0
    %208 = vmatprep.subr.mxu0 0.0
    %209 = vmatpush1.msra.mxu0 0.0
    %210 = vmatprep.subr.mxu0 0.0
    %211 = vmatpush1.msra.mxu0 0.0
    %212 = vmatprep.subr.mxu0 0.0
    %213 = vmatpush1.msra.mxu0 0.0
    %214 = vmatprep.subr.mxu0 0.0
    %215 = vmatpush1.msra.mxu0 0.0
    %216 = vmatprep.subr.mxu0 0.0
    %217 = vmatpush1.msra.mxu0 0.0
    %218 = vmatprep.subr.mxu0 0.0
    %219 = vmatpush1.msra.mxu0 0.0
    %220 = vmatprep.subr.mxu0 0.0
    %221 = vmatpush1.msra.mxu0 0.0
    %222 = vmatprep.mubr.f32.mxu0 0.0
    %223 = vmatmul.mubr.f32.gmra.mrb[0].mxu0 %v76
    %v224 = vpop.f32.mrb[0].mxu0
    %v225 = vadd.f32 %v70, %v224
    %v226 = vpop.f32.mrb[0].mxu0
    %227 = vmatprep.mubr.f32.mxu0 0.0
    %228 = vmatmul.mubr.f32.gmra.mrb[0].mxu0 %v79
    %v229 = vpop.f32.mrb[0].mxu0
    %v230 = vadd.f32 %v70, %v229
    %v231 = vpop.f32.mrb[0].mxu0
    %232 = vdwg.mxu0
    %233 = vmatprep.subr.mxu0 0.0
    %234 = vmatpush1.xpose.msra.mxu0 %v150
    %235 = vmatprep.subr.mxu0 0.0
    %236 = vmatpush1.xpose.msra.mxu0 0.0
    %237 = vmatprep.subr.mxu0 0.0
    %238 = vmatpush1.xpose.msra.mxu0 0.0
    %239 = vmatprep.subr.mxu0 0.0
    %240 = vmatpush1.xpose.msra.mxu0 0.0
    %241 = vmatprep.subr.mxu0 0.0
    %242 = vmatpush1.xpose.msra.mxu0 0.0
    %243 = vmatprep.subr.mxu0 0.0
    %244 = vmatpush1.xpose.msra.mxu0 0.0
    %245 = vmatprep.subr.mxu0 0.0
    %246 = vmatpush1.xpose.msra.mxu0 0.0
    %247 = vmatprep.subr.mxu0 0.0
    %248 = vmatpush1.xpose.msra.mxu0 0.0
    %249 = vmatprep.subr.mxu0 0.0
    %250 = vmatpush1.xpose.msra.mxu0 0.0
    %251 = vmatprep.subr.mxu0 0.0
    %252 = vmatpush1.xpose.msra.mxu0 0.0
    %253 = vmatprep.subr.mxu0 0.0
    %254 = vmatpush1.xpose.msra.mxu0 0.0
    %255 = vmatprep.subr.mxu0 0.0
    %256 = vmatpush1.xpose.msra.mxu0 0.0
    %257 = vmatprep.subr.mxu0 0.0
    %258 = vmatpush1.xpose.msra.mxu0 0.0
    %259 = vmatprep.subr.mxu0 0.0
    %260 = vmatpush1.xpose.msra.mxu0 0.0
    %261 = vmatprep.subr.mxu0 0.0
    %262 = vmatpush1.xpose.msra.mxu0 0.0
    %263 = vmatprep.subr.mxu0 0.0
    %264 = vmatpush1.xpose.msra.mxu0 0.0
    %265 = vmatprep.subr.mxu0 0.0
    %266 = vmatpush1.xpose.msra.mxu0 0.0
    %267 = vmatprep.subr.mxu0 0.0
    %268 = vmatpush1.xpose.msra.mxu0 0.0
    %269 = vmatprep.subr.mxu0 0.0
    %270 = vmatpush1.xpose.msra.mxu0 0.0
    %271 = vmatprep.subr.mxu0 0.0
    %272 = vmatpush1.xpose.msra.mxu0 0.0
    %273 = vmatprep.subr.mxu0 0.0
    %274 = vmatpush1.xpose.msra.mxu0 0.0
    %275 = vmatprep.subr.mxu0 0.0
    %276 = vmatpush1.xpose.msra.mxu0 0.0
    %277 = vmatprep.subr.mxu0 0.0
    %278 = vmatpush1.xpose.msra.mxu0 0.0
    %279 = vmatprep.subr.mxu0 0.0
    %280 = vmatpush1.xpose.msra.mxu0 0.0
    %281 = vmatprep.subr.mxu0 0.0
    %282 = vmatpush1.xpose.msra.mxu0 0.0
    %283 = vmatprep.subr.mxu0 0.0
    %284 = vmatpush1.xpose.msra.mxu0 0.0
    %285 = vmatprep.subr.mxu0 0.0
    %286 = vmatpush1.xpose.msra.mxu0 0.0
    %287 = vmatprep.subr.mxu0 0.0
    %288 = vmatpush1.xpose.msra.mxu0 0.0
    %289 = vmatprep.subr.mxu0 0.0
    %290 = vmatpush1.xpose.msra.mxu0 0.0
    %291 = vmatprep.subr.mxu0 0.0
    %292 = vmatpush1.xpose.msra.mxu0 0.0
    %293 = vmatprep.subr.mxu0 0.0
    %294 = vmatpush1.xpose.msra.mxu0 0.0
    %295 = vmatprep.subr.mxu0 0.0
    %296 = vmatpush1.xpose.msra.mxu0 0.0
    %297 = vmatprep.mubr.f32.mxu0 0.0
    %298 = vmatmul.mubr.f32.gmra.mrb[0].mxu0 %v148
    %v299 = vpop.f32.mrb[0].mxu0
    %v300 = vadd.f32 0.0, %v299
    %v301 = vpop.f32.mrb[0].mxu0
    %302 = vdwg.mxu0
    %303 = vmatprep.subr.mxu0 0.0
    %304 = vmatpush1.xpose.msra.mxu0 %v156
    %305 = vmatprep.subr.mxu0 0.0
    %306 = vmatpush1.xpose.msra.mxu0 0.0
    %307 = vmatprep.subr.mxu0 0.0
    %308 = vmatpush1.xpose.msra.mxu0 0.0
    %309 = vmatprep.subr.mxu0 0.0
    %310 = vmatpush1.xpose.msra.mxu0 0.0
    %311 = vmatprep.subr.mxu0 0.0
    %312 = vmatpush1.xpose.msra.mxu0 0.0
    %313 = vmatprep.subr.mxu0 0.0
    %314 = vmatpush1.xpose.msra.mxu0 0.0
    %315 = vmatprep.subr.mxu0 0.0
    %316 = vmatpush1.xpose.msra.mxu0 0.0
    %317 = vmatprep.subr.mxu0 0.0
    %318 = vmatpush1.xpose.msra.mxu0 0.0
    %319 = vmatprep.subr.mxu0 0.0
    %320 = vmatpush1.xpose.msra.mxu0 0.0
    %321 = vmatprep.subr.mxu0 0.0
    %322 = vmatpush1.xpose.msra.mxu0 0.0
    %323 = vmatprep.subr.mxu0 0.0
    %324 = vmatpush1.xpose.msra.mxu0 0.0
    %325 = vmatprep.subr.mxu0 0.0
    %326 = vmatpush1.xpose.msra.mxu0 0.0
    %327 = vmatprep.subr.mxu0 0.0
    %328 = vmatpush1.xpose.msra.mxu0 0.0
    %329 = vmatprep.subr.mxu0 0.0
    %330 = vmatpush1.xpose.msra.mxu0 0.0
    %331 = vmatprep.subr.mxu0 0.0
    %332 = vmatpush1.xpose.msra.mxu0 0.0
    %333 = vmatprep.subr.mxu0 0.0
    %334 = vmatpush1.xpose.msra.mxu0 0.0
    %335 = vmatprep.subr.mxu0 0.0
    %336 = vmatpush1.xpose.msra.mxu0 0.0
    %337 = vmatprep.subr.mxu0 0.0
    %338 = vmatpush1.xpose.msra.mxu0 0.0
    %339 = vmatprep.subr.mxu0 0.0
    %340 = vmatpush1.xpose.msra.mxu0 0.0
    %341 = vmatprep.subr.mxu0 0.0
    %342 = vmatpush1.xpose.msra.mxu0 0.0
    %343 = vmatprep.subr.mxu0 0.0
    %344 = vmatpush1.xpose.msra.mxu0 0.0
    %345 = vmatprep.subr.mxu0 0.0
    %346 = vmatpush1.xpose.msra.mxu0 0.0
    %347 = vmatprep.subr.mxu0 0.0
    %348 = vmatpush1.xpose.msra.mxu0 0.0
    %349 = vmatprep.subr.mxu0 0.0
    %350 = vmatpush1.xpose.msra.mxu0 0.0
    %351 = vmatprep.subr.mxu0 0.0
    %352 = vmatpush1.xpose.msra.mxu0 0.0
    %353 = vmatprep.subr.mxu0 0.0
    %354 = vmatpush1.xpose.msra.mxu0 0.0
    %355 = vmatprep.subr.mxu0 0.0
    %356 = vmatpush1.xpose.msra.mxu0 0.0
    %357 = vmatprep.subr.mxu0 0.0
    %358 = vmatpush1.xpose.msra.mxu0 0.0
    %359 = vmatprep.subr.mxu0 0.0
    %360 = vmatpush1.xpose.msra.mxu0 0.0
    %361 = vmatprep.subr.mxu0 0.0
    %362 = vmatpush1.xpose.msra.mxu0 0.0
    %363 = vmatprep.subr.mxu0 0.0
    %364 = vmatpush1.xpose.msra.mxu0 0.0
    %365 = vmatprep.subr.mxu0 0.0
    %366 = vmatpush1.xpose.msra.mxu0 0.0
    %367 = vmatprep.mubr.f32.mxu0 0.0
    %368 = vmatmul.mubr.f32.gmra.mrb[0].mxu0 %v154
    %v369 = vpop.f32.mrb[0].mxu0
    %v370 = vadd.f32 0.0, %v369
    %v371 = vpop.f32.mrb[0].mxu0
    %372 = vdwg.mxu0
    %vm373 = vcmask 64512
    %v374 = vsel %vm373, %v300, -inf
    %375 = vmax.xlane.f32.xlu0 %v374
    %v376 = vpop.xlane.xlu0 %375
    %v377 = vsel %vm373, %v370, -inf
    %378 = vmax.xlane.f32.xlu0 %v377
    %v379 = vpop.xlane.xlu0 %378
    %v380 = vsub.f32 %v300, %v376
    %v381 = vsub.f32 %v370, %v379
    %v382 = vmul.f32 %v380, 1.442695
    %v383 = vpow.pop %v382
    %v384 = vmul.f32 %v381, 1.442695
    %v385 = vpow.pop %v384
    %v386 = vsel %vm373, %v383, 0.0
    %387 = vadd.xlane.f32.xlu0 %v386
    %v388 = vpop.xlane.xlu0 %387
    %v389 = vsel %vm373, %v385, 0.0
    %390 = vadd.xlane.f32.xlu0 %v389
    %v391 = vpop.xlane.xlu0 %390
    %v392 = vrcp.pop %v388
    %v393 = vmul.f32 1.0, %v392
    %v394 = vrcp.pop %v391
    %v395 = vmul.f32 1.0, %v394
    %v396 = vmul.f32 %v383, %v393
    %v397 = vmul.f32 %v385, %v395
    %v399 = vsel %vm373, %v396, 0
    %401 = vmatprep.subr.mxu0 0.0
    %402 = vmatpush1.msra.mxu0 %v225
    %403 = vmatprep.subr.mxu0 0.0
    %404 = vmatpush1.msra.mxu0 0.0
    %405 = vmatprep.subr.mxu0 0.0
    %406 = vmatpush1.msra.mxu0 0.0
    %407 = vmatprep.subr.mxu0 0.0
    %408 = vmatpush1.msra.mxu0 0.0
    %409 = vmatprep.subr.mxu0 0.0
    %410 = vmatpush1.msra.mxu0 0.0
    %411 = vmatprep.subr.mxu0 0.0
    %412 = vmatpush1.msra.mxu0 0.0
    %413 = vmatprep.subr.mxu0 0.0
    %414 = vmatpush1.msra.mxu0 0.0
    %415 = vmatprep.subr.mxu0 0.0
    %416 = vmatpush1.msra.mxu0 0.0
    %417 = vmatprep.subr.mxu0 0.0
    %418 = vmatpush1.msra.mxu0 0.0
    %419 = vmatprep.subr.mxu0 0.0
    %420 = vmatpush1.msra.mxu0 0.0
    %421 = vmatprep.subr.mxu0 0.0
    %422 = vmatpush1.msra.mxu0 0.0
    %423 = vmatprep.subr.mxu0 0.0
    %424 = vmatpush1.msra.mxu0 0.0
    %425 = vmatprep.subr.mxu0 0.0
    %426 = vmatpush1.msra.mxu0 0.0
    %427 = vmatprep.subr.mxu0 0.0
    %428 = vmatpush1.msra.mxu0 0.0
    %429 = vmatprep.subr.mxu0 0.0
    %430 = vmatpush1.msra.mxu0 0.0
    %431 = vmatprep.subr.mxu0 0.0
    %432 = vmatpush1.msra.mxu0 0.0
    %433 = vmatprep.subr.mxu0 0.0
    %434 = vmatpush1.msra.mxu0 0.0
    %435 = vmatprep.subr.mxu0 0.0
    %436 = vmatpush1.msra.mxu0 0.0
    %437 = vmatprep.subr.mxu0 0.0
    %438 = vmatpush1.msra.mxu0 0.0
    %439 = vmatprep.subr.mxu0 0.0
    %440 = vmatpush1.msra.mxu0 0.0
    %441 = vmatprep.subr.mxu0 0.0
    %442 = vmatpush1.msra.mxu0 0.0
    %443 = vmatprep.subr.mxu0 0.0
    %444 = vmatpush1.msra.mxu0 0.0
    %445 = vmatprep.subr.mxu0 0.0
    %446 = vmatpush1.msra.mxu0 0.0
    %447 = vmatprep.subr.mxu0 0.0
    %448 = vmatpush1.msra.mxu0 0.0
    %449 = vmatprep.subr.mxu0 0.0
    %450 = vmatpush1.msra.mxu0 0.0
    %451 = vmatprep.subr.mxu0 0.0
    %452 = vmatpush1.msra.mxu0 0.0
    %453 = vmatprep.subr.mxu0 0.0
    %454 = vmatpush1.msra.mxu0 0.0
    %455 = vmatprep.subr.mxu0 0.0
    %456 = vmatpush1.msra.mxu0 0.0
    %457 = vmatprep.subr.mxu0 0.0
    %458 = vmatpush1.msra.mxu0 0.0
    %459 = vmatprep.subr.mxu0 0.0
    %460 = vmatpush1.msra.mxu0 0.0
    %461 = vmatprep.subr.mxu0 0.0
    %462 = vmatpush1.msra.mxu0 0.0
    %463 = vmatprep.subr.mxu0 0.0
    %464 = vmatpush1.msra.mxu0 0.0
    %465 = vmatprep.mubr.f32.mxu0 0.0
    %466 = vmatmul.mubr.f32.gmra.mrb[0].mxu0 %v399
    %v467 = vpop.f32.mrb[0].mxu0
    %v468 = vadd.f32 0.0, %v467
    %v469 = vpop.f32.mrb[0].mxu0
    %470 = vdwg.mxu0
    %v472 = vsel %vm373, %v397, 0
    %474 = vmatprep.subr.mxu0 0.0
    %475 = vmatpush1.msra.mxu0 %v230
    %476 = vmatprep.subr.mxu0 0.0
    %477 = vmatpush1.msra.mxu0 0.0
    %478 = vmatprep.subr.mxu0 0.0
    %479 = vmatpush1.msra.mxu0 0.0
    %480 = vmatprep.subr.mxu0 0.0
    %481 = vmatpush1.msra.mxu0 0.0
    %482 = vmatprep.subr.mxu0 0.0
    %483 = vmatpush1.msra.mxu0 0.0
    %484 = vmatprep.subr.mxu0 0.0
    %485 = vmatpush1.msra.mxu0 0.0
    %486 = vmatprep.subr.mxu0 0.0
    %487 = vmatpush1.msra.mxu0 0.0
    %488 = vmatprep.subr.mxu0 0.0
    %489 = vmatpush1.msra.mxu0 0.0
    %490 = vmatprep.subr.mxu0 0.0
    %491 = vmatpush1.msra.mxu0 0.0
    %492 = vmatprep.subr.mxu0 0.0
    %493 = vmatpush1.msra.mxu0 0.0
    %494 = vmatprep.subr.mxu0 0.0
    %495 = vmatpush1.msra.mxu0 0.0
    %496 = vmatprep.subr.mxu0 0.0
    %497 = vmatpush1.msra.mxu0 0.0
    %498 = vmatprep.subr.mxu0 0.0
    %499 = vmatpush1.msra.mxu0 0.0
    %500 = vmatprep.subr.mxu0 0.0
    %501 = vmatpush1.msra.mxu0 0.0
    %502 = vmatprep.subr.mxu0 0.0
    %503 = vmatpush1.msra.mxu0 0.0
    %504 = vmatprep.subr.mxu0 0.0
    %505 = vmatpush1.msra.mxu0 0.0
    %506 = vmatprep.subr.mxu0 0.0
    %507 = vmatpush1.msra.mxu0 0.0
    %508 = vmatprep.subr.mxu0 0.0
    %509 = vmatpush1.msra.mxu0 0.0
    %510 = vmatprep.subr.mxu0 0.0
    %511 = vmatpush1.msra.mxu0 0.0
    %512 = vmatprep.subr.mxu0 0.0
    %513 = vmatpush1.msra.mxu0 0.0
    %514 = vmatprep.subr.mxu0 0.0
    %515 = vmatpush1.msra.mxu0 0.0
    %516 = vmatprep.subr.mxu0 0.0
    %517 = vmatpush1.msra.mxu0 0.0
    %518 = vmatprep.subr.mxu0 0.0
    %519 = vmatpush1.msra.mxu0 0.0
    %520 = vmatprep.subr.mxu0 0.0
    %521 = vmatpush1.msra.mxu0 0.0
    %522 = vmatprep.subr.mxu0 0.0
    %523 = vmatpush1.msra.mxu0 0.0
    %524 = vmatprep.subr.mxu0 0.0
    %525 = vmatpush1.msra.mxu0 0.0
    %526 = vmatprep.subr.mxu0 0.0
    %527 = vmatpush1.msra.mxu0 0.0
    %528 = vmatprep.subr.mxu0 0.0
    %529 = vmatpush1.msra.mxu0 0.0
    %530 = vmatprep.subr.mxu0 0.0
    %531 = vmatpush1.msra.mxu0 0.0
    %532 = vmatprep.subr.mxu0 0.0
    %533 = vmatpush1.msra.mxu0 0.0
    %534 = vmatprep.subr.mxu0 0.0
    %535 = vmatpush1.msra.mxu0 0.0
    %536 = vmatprep.subr.mxu0 0.0
    %537 = vmatpush1.msra.mxu0 0.0
    %538 = vmatprep.mubr.f32.mxu0 0.0
    %539 = vmatmul.mubr.f32.gmra.mrb[0].mxu0 %v472
    %v540 = vpop.f32.mrb[0].mxu0
    %v541 = vadd.f32 0.0, %v540
    %v542 = vpop.f32.mrb[0].mxu0
    %543 = vdwg.mxu0
    %vm544 = vcmask 130048
    %545 = vst.msk [vmem:[#allocation7] sm:$0xff] %vm544, %v468
    %546 = vst.msk [vmem:[#allocation7 + $0x8] sm:$0xff] %vm544, %v541
    // Predicated region
    $region22: #{tpu_custom_call.1} parent=1 // pred_check
      _
    $region23: #{tpu_custom_call.1} parent=1 // pred_check_branch
      %548 = sbr.rel (0) target = $region25
    $region24: #{tpu_custom_call.1} parent=1 // pred_region
      %s550 = ssub.s32 256, 256
      %551 = vsyncadd [#allocation4], %s550
      %s552 = sshll.u32 [#allocation7], 4
      %s553 = int_to_ptr.vmem [resolvable:$true] %s552
      %558 = dma.vmem_to_hbm [thread:$0]  %s553, 256, %s3, [#allocation4], 128, 128, 8
    $region25: #{tpu_custom_call.1} parent=1 // pred_fallthru
      _
    // Predicated region
    $region26: #{tpu_custom_call.1} parent=1 // pred_check
      _
    $region27: #{tpu_custom_call.1} parent=1 // pred_check_branch
      %560 = sbr.rel (0) target = $region29
    $region28: #{tpu_custom_call.1} parent=1 // pred_region
      %561 = dma.done [#allocation4], 256
    $region29: #{tpu_custom_call.1} parent=1 // pred_fallthru
      _
    %562 = vsyncpa [#allocation3], 1
    %563 = vsyncpa [#allocation6], 1
    %564 = vsyncpa [#allocation4], 1

</llo_original>
